<compile_context>
chip_gen: v6e
topology: v6e:2x2x1
jax: 0.10.0
libtpu: 0.0.40
codegen_flags: <defaults>
</compile_context>

<pallas_src>
import functools

import jax
import jax.numpy as jnp
from jax.experimental import pallas as pl
from jax.experimental.pallas import tpu as pltpu

_LANES = 128
_SUBLANES = 8
_MAX_BLOCK_ROWS = 8192        # (8192, 128): 4 MiB f32 logits + 2 MiB bf16 labels
_CHUNK_ROWS = 512             # in-kernel streaming chunk (256 KiB f32 temps)
_VMEM_LIMIT = 32 * 1024 * 1024


def _modulator(one_minus_pt, gamma):
    """(1 - pt) ** gamma; repeated multiply for small integer gamma."""
    g = float(gamma)
    if g == 0.0:
        return jnp.ones_like(one_minus_pt)
    if g.is_integer() and 1.0 <= g <= 8.0:
        out = one_minus_pt
        for _ in range(int(g) - 1):
            out = out * one_minus_pt
        return out
    return one_minus_pt ** jnp.float32(g)


def _focal_elements(x, z, alpha, gamma, *, in_kernel):
    """Per-element focal loss (f32 in, f32 out), transcendentals fused."""
    is_pos = z == 1.0
    alpha_t = jnp.where(is_pos, jnp.float32(alpha), jnp.float32(1.0 - alpha))

    e = jnp.exp(-jnp.abs(x))              # exp(-|x|) in (0, 1]
    denom = 1.0 + e
    if in_kernel:
        # approx=False keeps exact parity with the reference sigmoid.
        r = pl.reciprocal(denom, approx=False)
    else:
        r = 1.0 / denom                   # sigmoid(|x|)
    q = e * r                             # 1 - sigmoid(|x|)
    p = jnp.where(x >= 0.0, r, q)         # sigmoid(x)
    one_minus_p = jnp.where(x >= 0.0, q, r)
    one_minus_pt = jnp.where(is_pos, one_minus_p, p)

    # BCEWithLogitsLoss(reduction='none'), numerically stable form.
    ce = jnp.maximum(x, 0.0) - x * z + jnp.log1p(e)
    return alpha_t * _modulator(one_minus_pt, gamma) * ce


def _accum_rows(acc_ref, v):
    """Fold an (m, 128) chunk into the (8, 128) accumulator (VPU adds only)."""
    m = v.shape[0]
    m8 = (m // _SUBLANES) * _SUBLANES
    if m8:
        acc_ref[...] += v[:m8].reshape(-1, _SUBLANES, _LANES).sum(axis=0)
    if m - m8:
        acc_ref[0:(m - m8), :] += v[m8:, :]


def _focal_reduce_kernel(logits_ref, label_ref, out_ref, acc_ref, *,
                         alpha, gamma, steps_per_part, full_blocks,
                         total_blocks, valid_rows, needs_guard):
    p = pl.program_id(0)
    s = pl.program_id(1)
    block_rows = logits_ref.shape[0]
    g = p * steps_per_part + s            # global block index

    @pl.when(s == 0)
    def _():
        acc_ref[...] = jnp.zeros_like(acc_ref)

    chunk = min(block_rows, _CHUNK_ROWS)
    nfull = block_rows // chunk
    rem = block_rows - nfull * chunk

    def loss_chunk(r0, m, masked):
        x = logits_ref[pl.ds(r0, m), :].astype(jnp.float32)
        z = label_ref[pl.ds(r0, m), :].astype(jnp.float32)
        v = _focal_elements(x, z, alpha, gamma, in_kernel=True)
        if masked:
            row = jax.lax.broadcasted_iota(jnp.int32, (m, _LANES), 0)
            ok = (g * block_rows + r0 + row) < valid_rows
            v = jnp.where(ok, v, jnp.float32(0.0))
        return v

    def accum_block(masked):
        @pl.loop(0, nfull)
        def _(c):
            r0 = c * chunk
            if chunk % _SUBLANES == 0:
                r0 = pl.multiple_of(r0, chunk)
            _accum_rows(acc_ref, loss_chunk(r0, chunk, masked))

        if rem:
            _accum_rows(acc_ref, loss_chunk(nfull * chunk, rem, masked))

    if needs_guard:
        @pl.when(g < full_blocks)          # fully-valid blocks: mask-free path
        def _():
            accum_block(False)

        @pl.when(jnp.logical_and(g >= full_blocks, g < total_blocks))
        def _():                           # overhanging last block: masked path
            accum_block(True)
        # Blocks with g >= total_blocks (odd-partition overhang) are skipped.
    else:
        accum_block(False)

    @pl.when(s == steps_per_part - 1)
    def _():
        out_ref[0, 0] = jnp.sum(acc_ref[...])   # single cross-lane reduce


def _focal_elementwise_kernel(logits_ref, label_ref, out_ref, *, alpha, gamma):
    block_rows = logits_ref.shape[0]
    chunk = min(block_rows, _CHUNK_ROWS)
    nfull = block_rows // chunk
    rem = block_rows - nfull * chunk

    def compute(r0, m):
        x = logits_ref[pl.ds(r0, m), :].astype(jnp.float32)
        z = label_ref[pl.ds(r0, m), :].astype(jnp.float32)
        out_ref[pl.ds(r0, m), :] = _focal_elements(x, z, alpha, gamma,
                                                   in_kernel=True)

    @pl.loop(0, nfull)
    def _(c):
        r0 = c * chunk
        if chunk % _SUBLANES == 0:
            r0 = pl.multiple_of(r0, chunk)
        compute(r0, chunk)

    if rem:
        compute(nfull * chunk, rem)


def focal_loss_v1(logits, label, alpha=0.25, gamma=2.0, reduction="mean"):
    """JAX/Pallas equivalent of FocalLossV1.forward."""
    if reduction not in ("mean", "sum", "none"):
        raise ValueError(f"unsupported reduction: {reduction}")

    orig_shape = logits.shape
    n = 1
    for d in orig_shape:
        n *= int(d)

    flat_logits = jnp.reshape(logits, (-1,))
    flat_label = jnp.reshape(label, (-1,))
    rows = n // _LANES            # lane-dense main slab; no wrapper pad copy
    main_n = rows * _LANES
    tail_n = n - main_n           # <128 leftover elements handled in plain jnp

    if rows > 0:
        lg = flat_logits[:main_n] if tail_n else flat_logits
        lb = flat_label[:main_n] if tail_n else flat_label
        if lb.dtype.itemsize > 2:
            # Exact for {0,1} targets; halves the label HBM read bytes.
            lb = lb.astype(jnp.bfloat16)
        logits2d = jnp.reshape(lg, (rows, _LANES))
        label2d = jnp.reshape(lb, (rows, _LANES))
        block_rows = min(rows, _MAX_BLOCK_ROWS)

    tail_loss = None
    if tail_n:
        tail_loss = _focal_elements(flat_logits[main_n:].astype(jnp.float32),
                                    flat_label[main_n:].astype(jnp.float32),
                                    alpha, gamma, in_kernel=False)

    if reduction == "none":
        parts = []
        if rows > 0:
            tile = pl.BlockSpec((block_rows, _LANES), lambda i: (i, 0))
            out2d = pl.pallas_call(
                functools.partial(_focal_elementwise_kernel,
                                  alpha=alpha, gamma=gamma),
                out_shape=jax.ShapeDtypeStruct((rows, _LANES), jnp.float32),
                grid_spec=pltpu.PrefetchScalarGridSpec(
                    num_scalar_prefetch=0,
                    grid=(pl.cdiv(rows, block_rows),),
                    in_specs=[tile, tile],
                    out_specs=tile),
                compiler_params=pltpu.CompilerParams(
                    dimension_semantics=("parallel",),
                    vmem_limit_bytes=_VMEM_LIMIT),
            )(logits2d, label2d)
            parts.append(jnp.reshape(out2d, (-1,)))
        if tail_n:
            parts.append(tail_loss)
        flat_out = parts[0] if len(parts) == 1 else jnp.concatenate(parts)
        return jnp.reshape(flat_out, orig_shape)

    # 'mean' / 'sum' reductions.
    total = jnp.float32(0.0)
    if rows > 0:
        total_blocks = pl.cdiv(rows, block_rows)
        # Unconditional 2-way split over row blocks (v7x megacore); on 1-TC
        # chips the extra "parallel" axis is just an outer sequential loop.
        num_parts = 2 if total_blocks >= 2 else 1
        steps_per_part = pl.cdiv(total_blocks, num_parts)
        full_blocks = rows // block_rows
        needs_guard = num_parts * steps_per_part * block_rows != rows
        last_block = total_blocks - 1

        tile = pl.BlockSpec(
            (block_rows, _LANES),
            lambda p, s: (jnp.minimum(p * steps_per_part + s, last_block), 0))

        partials = pl.pallas_call(
            functools.partial(
                _focal_reduce_kernel, alpha=alpha, gamma=gamma,
                steps_per_part=steps_per_part, full_blocks=full_blocks,
                total_blocks=total_blocks, valid_rows=rows,
                needs_guard=needs_guard),
            out_shape=jax.ShapeDtypeStruct((num_parts, 1), jnp.float32),
            grid_spec=pltpu.PrefetchScalarGridSpec(
                num_scalar_prefetch=0,
                grid=(num_parts, steps_per_part),
                in_specs=[tile, tile],
                out_specs=pl.BlockSpec((1, 1), lambda p, s: (p, 0),
                                       memory_space=pltpu.SMEM),
                scratch_shapes=[pltpu.VMEM((_SUBLANES, _LANES), jnp.float32)]),
            compiler_params=pltpu.CompilerParams(
                dimension_semantics=("parallel", "arbitrary"),
                vmem_limit_bytes=_VMEM_LIMIT),
        )(logits2d, label2d)
        total = total + jnp.sum(partials)
    if tail_n:
        total = total + jnp.sum(tail_loss)
    if reduction == "mean":
        total = total / jnp.float32(n)
    return total


def _reference_elems(logits, label, alpha=0.25, gamma=2.0):
    logits = logits.astype(jnp.float32)
    label_f = label.astype(jnp.float32)
    alpha_t = jnp.where(label_f == 1.0, alpha, 1.0 - alpha)
    probs = jax.nn.sigmoid(logits)
    pt = jnp.where(label_f == 1.0, probs, 1.0 - probs)
    ce = (jnp.maximum(logits, 0.0) - logits * label_f
          + jnp.log1p(jnp.exp(-jnp.abs(logits))))
    return alpha_t * (1.0 - pt) ** gamma * ce


if __name__ == "__main__":
    key = jax.random.PRNGKey(0)
    k1, k2, k3, k4, k5, k6 = jax.random.split(key, 6)

    # FocalLossV1 has no trainable parameters; alpha/gamma are constants.
    B, C, H, W = 2, 4, 16, 16
    logits = jax.random.normal(k1, (B, C, H, W), dtype=jnp.float32) * 2.0
    label = jax.random.bernoulli(k2, 0.3, (B, C, H, W)).astype(jnp.float32)

    # mean reduction (default).
    loss = focal_loss_v1(logits, label, alpha=0.25, gamma=2.0,
                         reduction="mean")
    loss = jax.block_until_ready(loss)
    ref = jnp.mean(_reference_elems(logits, label))
    assert jnp.allclose(loss, ref, rtol=1e-5, atol=1e-6), (loss, ref)

    # reduction='none' path.
    loss_none = focal_loss_v1(logits, label, reduction="none")
    loss_none = jax.block_until_ready(loss_none)
    ref_none = _reference_elems(logits, label)
    assert jnp.allclose(loss_none, ref_none, rtol=1e-5, atol=1e-6)

    # Ragged size + bf16 logits: exercises the jnp lane-tail path, the sub-8
    # row accumulator path and native-dtype in-kernel casting.
    logits_r = (jax.random.normal(k3, (2, 3, 37, 53), dtype=jnp.float32) * 2.0
                ).astype(jnp.bfloat16)
    label_r = jax.random.bernoulli(k4, 0.3, (2, 3, 37, 53)).astype(jnp.float32)
    loss_r = focal_loss_v1(logits_r, label_r, reduction="sum")
    loss_r = jax.block_until_ready(loss_r)
    ref_r = jnp.sum(_reference_elems(logits_r.astype(jnp.float32), label_r))
    assert jnp.allclose(loss_r, ref_r, rtol=1e-4, atol=1e-4), (loss_r, ref_r)

    loss_rn = focal_loss_v1(logits_r, label_r, reduction="none")
    loss_rn = jax.block_until_ready(loss_rn)
    ref_rn = _reference_elems(logits_r.astype(jnp.float32), label_r)
    assert jnp.allclose(loss_rn, ref_rn, rtol=1e-4, atol=1e-5)

    # Larger ragged input: exercises the multi-block grid, the 2-way
    # "parallel" partition (megacore), the overhanging last block and the
    # fully-out-of-range block of the odd partition, plus the lane tail.
    shape_l = (2, 4, 523, 505)    # 2,112,920 elems -> 16507 rows + 24 tail
    logits_l = jax.random.normal(k5, shape_l, dtype=jnp.float32) * 2.0
    label_l = jax.random.bernoulli(k6, 0.3, shape_l).astype(jnp.float32)
    loss_l = focal_loss_v1(logits_l, label_l, reduction="mean")
    loss_l = jax.block_until_ready(loss_l)
    ref_l = jnp.mean(_reference_elems(logits_l, label_l))
    assert jnp.allclose(loss_l, ref_l, rtol=1e-4, atol=1e-6), (loss_l, ref_l)

    print("KERNEL_OK")
</pallas_src>

<mosaic_0001>
module attributes {stable_mosaic.version = 11 : i64} {
  func.func @_focal_reduce_kernel(%arg0: i32, %arg1: i32, %arg2: memref<16x128xf32, #tpu.memory_space<vmem>>, %arg3: memref<16x128xbf16, #tpu.memory_space<vmem>>, %arg4: memref<1x1xf32, #tpu.memory_space<smem>>, %arg5: memref<8x128xf32, #tpu.memory_space<vmem>>) attributes {dimension_semantics = [#tpu.dimension_semantics<parallel>, #tpu.dimension_semantics<arbitrary>], iteration_bounds = array<i64: 1, 1>, scalar_prefetch = 0 : i64, scratch_operands = 1 : i64, tpu.core_type = #tpu.core_type<tc>, window_params = [{transform_indices = @transform_0, window_bounds = array<i64: 16, 128>}, {transform_indices = @transform_1, window_bounds = array<i64: 16, 128>}, {transform_indices = @transform_2, window_bounds = array<i64: 1, 1>}]} {
    %c0_i32 = arith.constant 0 : i32
    %0 = arith.cmpi eq, %arg1, %c0_i32 : i32
    %1 = arith.extui %0 : i1 to i32
    %c0_i32_0 = arith.constant 0 : i32
    %2 = arith.cmpi ne, %1, %c0_i32_0 : i32
    scf.if %2 {
      %cst_19 = arith.constant 0.000000e+00 : f32
      %49 = vector.broadcast %cst_19 : f32 to vector<8x128xf32>
      %c0_20 = arith.constant 0 : index
      %c0_21 = arith.constant 0 : index
      %50 = vector.load %arg5[%c0_20, %c0_21] : memref<8x128xf32, #tpu.memory_space<vmem>>, vector<8x128xf32>
      tpu.vector_store %arg5[%c0_20, %c0_21], %49 {strides = array<i32>} : memref<8x128xf32, #tpu.memory_space<vmem>>, vector<8x128xf32>,
    } else {
    }
    %c0_i32_1 = arith.constant 0 : i32
    %c1_i32 = arith.constant 1 : i32
    %3 = arith.muli %c0_i32_1, %c1_i32 : i32
    %c0_i32_2 = arith.constant 0 : i32
    %4 = arith.addi %c0_i32_2, %3 : i32
    %c16_i32 = arith.constant 16 : i32
    %5 = arith.muli %4, %c16_i32 : i32
    %6 = tpu.assume_multiple %5, 16 : i32
    %7 = arith.index_cast %6 : i32 to index
    %c0 = arith.constant 0 : index
    %8 = vector.load %arg2[%7, %c0] : memref<16x128xf32, #tpu.memory_space<vmem>>, vector<16x128xf32>
    %9 = arith.index_cast %6 : i32 to index
    %c0_3 = arith.constant 0 : index
    %10 = vector.load %arg3[%9, %c0_3] : memref<16x128xbf16, #tpu.memory_space<vmem>>, vector<16x128xbf16>
    %11 = arith.extf %10 : vector<16x128xbf16> to vector<16x128xf32>
    %cst = arith.constant 1.000000e+00 : f32
    %12 = vector.broadcast %cst : f32 to vector<16x128xf32>
    %13 = arith.cmpf oeq, %11, %12 : vector<16x128xf32>
    %cst_4 = arith.constant 2.500000e-01 : f32
    %cst_5 = arith.constant 7.500000e-01 : f32
    %14 = vector.broadcast %cst_4 : f32 to vector<16x128xf32>
    %15 = vector.broadcast %cst_5 : f32 to vector<16x128xf32>
    %16 = arith.select %13, %14, %15 : vector<16x128xi1>, vector<16x128xf32>
    %17 = math.absf %8 : vector<16x128xf32>
    %cst_6 = arith.constant 0.000000e+00 : f32
    %18 = vector.broadcast %cst_6 : f32 to vector<16x128xf32>
    %19 = arith.subf %18, %17 : vector<16x128xf32>
    %20 = math.exp %19 : vector<16x128xf32>
    %cst_7 = arith.constant 1.000000e+00 : f32
    %21 = vector.broadcast %cst_7 : f32 to vector<16x128xf32>
    %22 = arith.addf %21, %20 : vector<16x128xf32>
    %23 = tpu.reciprocal %22 : vector<16x128xf32> -> vector<16x128xf32>
    %24 = arith.mulf %20, %23 : vector<16x128xf32>
    %cst_8 = arith.constant 0.000000e+00 : f32
    %25 = vector.broadcast %cst_8 : f32 to vector<16x128xf32>
    %26 = arith.cmpf oge, %8, %25 : vector<16x128xf32>
    %27 = arith.select %26, %23, %24 : vector<16x128xi1>, vector<16x128xf32>
    %cst_9 = arith.constant 0.000000e+00 : f32
    %28 = vector.broadcast %cst_9 : f32 to vector<16x128xf32>
    %29 = arith.cmpf oge, %8, %28 : vector<16x128xf32>
    %30 = arith.select %29, %24, %23 : vector<16x128xi1>, vector<16x128xf32>
    %31 = arith.select %13, %30, %27 : vector<16x128xi1>, vector<16x128xf32>
    %cst_10 = arith.constant 0.000000e+00 : f32
    %32 = vector.broadcast %cst_10 : f32 to vector<16x128xf32>
    %33 = arith.maximumf %8, %32 : vector<16x128xf32>
    %34 = arith.mulf %8, %11 : vector<16x128xf32>
    %35 = arith.subf %33, %34 : vector<16x128xf32>
    %36 = math.log1p %20 : vector<16x128xf32>
    %37 = arith.addf %35, %36 : vector<16x128xf32>
    %38 = arith.mulf %31, %31 : vector<16x128xf32>
    %39 = arith.mulf %16, %38 : vector<16x128xf32>
    %40 = arith.mulf %39, %37 : vector<16x128xf32>
    %c0_11 = arith.constant 0 : index
    %c0_12 = arith.constant 0 : index
    %41 = vector.load %arg5[%c0_11, %c0_12] : memref<8x128xf32, #tpu.memory_space<vmem>>, vector<8x128xf32>
    %42 = vector.shape_cast %40 : vector<16x128xf32> to vector<2x8x128xf32>
    %cst_13 = arith.constant dense<0.000000e+00> : vector<8x128xf32>
    %43 = vector.multi_reduction <add>, %42, %cst_13 [0] : vector<2x8x128xf32> to vector<8x128xf32>
    %44 = arith.addf %41, %43 : vector<8x128xf32>
    %c0_14 = arith.constant 0 : index
    %c0_15 = arith.constant 0 : index
    %45 = vector.load %arg5[%c0_14, %c0_15] : memref<8x128xf32, #tpu.memory_space<vmem>>, vector<8x128xf32>
    tpu.vector_store %arg5[%c0_14, %c0_15], %44 {strides = array<i32>} : memref<8x128xf32, #tpu.memory_space<vmem>>, vector<8x128xf32>,
    %c1_i32_16 = arith.constant 1 : i32
    %c0_i32_17 = arith.constant 0 : i32
    %46 = arith.cmpi eq, %arg1, %c0_i32_17 : i32
    %47 = arith.extui %46 : i1 to i32
    %c0_i32_18 = arith.constant 0 : i32
    %48 = arith.cmpi ne, %47, %c0_i32_18 : i32
    scf.if %48 {
      %c0_19 = arith.constant 0 : index
      %c0_20 = arith.constant 0 : index
      %49 = vector.load %arg5[%c0_19, %c0_20] : memref<8x128xf32, #tpu.memory_space<vmem>>, vector<8x128xf32>
      %50 = vector.shape_cast %49 : vector<8x128xf32> to vector<1x8x128xf32>
      %cst_21 = arith.constant dense<0.000000e+00> : vector<1xf32>
      %51 = vector.multi_reduction <add>, %50, %cst_21 [1, 2] : vector<1x8x128xf32> to vector<1xf32>
      %52 = vector.shape_cast %51 : vector<1xf32> to vector<1x1x1xf32>
      %53 = vector.extract %52[0, 0, 0] : f32 from vector<1x1x1xf32>
      %c0_22 = arith.constant 0 : index
      %c0_23 = arith.constant 0 : index
      %54 = memref.load %arg4[%c0_22, %c0_23] : memref<1x1xf32, #tpu.memory_space<smem>>
      memref.store %53, %arg4[%c0_22, %c0_23] : memref<1x1xf32, #tpu.memory_space<smem>>
    } else {
    }
    return
  }
  func.func @transform_0(%arg0: i32, %arg1: i32) -> (i32, i32) {
    %c1_i32 = arith.constant 1 : i32
    %0 = arith.muli %arg0, %c1_i32 : i32
    %1 = arith.addi %0, %arg1 : i32
    %c0_i32 = arith.constant 0 : i32
    %2 = arith.minsi %1, %c0_i32 : i32
    %c0_i32_0 = arith.constant 0 : i32
    %c0_i32_1 = arith.constant 0 : i32
    return %2, %c0_i32_0 : i32, i32
  }
  func.func @transform_1(%arg0: i32, %arg1: i32) -> (i32, i32) {
    %c1_i32 = arith.constant 1 : i32
    %0 = arith.muli %arg0, %c1_i32 : i32
    %1 = arith.addi %0, %arg1 : i32
    %c0_i32 = arith.constant 0 : i32
    %2 = arith.minsi %1, %c0_i32 : i32
    %c0_i32_0 = arith.constant 0 : i32
    %c0_i32_1 = arith.constant 0 : i32
    return %2, %c0_i32_0 : i32, i32
  }
  func.func @transform_2(%arg0: i32, %arg1: i32) -> (i32, i32) {
    %c0_i32 = arith.constant 0 : i32
    %c0_i32_0 = arith.constant 0 : i32
    return %arg0, %c0_i32 : i32, i32
  }
}

</mosaic_0001>

<llo_original>
// kernel: tpu_custom_call.1
$region0: #{tpu_custom_call.1}
  #allocation0 [shape = 'u32[]', space=smem, size = 0x4, offset = 0x4, fixed_abs, tag = 'smem constant byte address 0x4 - core index']
  #allocation1 [shape = 'u32[144,128]{1,0:T(1,128)}', space=vmem, size = 0x12000, scoped, tag = 'internal scratch']
  #allocation2 [shape = 'f32[8,128]{1,0:T(8,128)}', space=vmem, size = 0x1000, scoped, tag = 'scratch operand']
  %s0 = inlined_call_operand.hbm [shape: f32[16,128], index: 0, kind: input, shape index: {}]
  %s1 = inlined_call_operand.hbm [shape: bf16[16,128], index: 1, kind: input, shape index: {}]
  %s2 = inlined_call_operand.hbm [shape: f32[1,1], index: 2, kind: output, shape index: {}]
  %s3 = sld [smem:[#allocation0]]
  $region34: #{tpu_custom_call.1} parent=0
    _
  %s5 = ssub.s32 1, %s3
  %s6 = scalar_select 0, %s5, %s3
  $region1: #{tpu_custom_call.1} parent=0
    #allocation3 [shape = 'u8[8192]{0}', space=vmem, size = 0x2000, scoped, tag = 'input window, operand 0, single buffered']
    #allocation4 [shape = 's32[1]{0}', space=sflag, size = 0x4, scoped, tag = 'scoped memory for tpu_custom_call.1']
    #allocation5 [shape = 's32[1]{0}', space=sflag, size = 0x4, scoped, tag = 'scoped memory for tpu_custom_call.1']
    #allocation6 [shape = 'u8[4096]{0}', space=vmem, size = 0x1000, scoped, tag = 'input window, operand 1, single buffered']
    #allocation7 [shape = 's32[1]{0}', space=sflag, size = 0x4, scoped, tag = 'scoped memory for tpu_custom_call.1']
    #allocation8 [shape = 'u8[512]{0}', space=smem, size = 0x200, scoped, tag = 'output window, operand 0, single buffered']
    %7 = vsyncpa [#allocation4], 0
    %8 = vsyncpa [#allocation7], 0
    %9 = vsyncpa [#allocation5], 0
    // Predicated region
    $region2: #{tpu_custom_call.1} parent=1 // pred_check
      _
    $region3: #{tpu_custom_call.1} parent=1 // pred_check_branch
      %11 = sbr.rel (0) target = $region5
    $region4: #{tpu_custom_call.1} parent=1 // pred_region
      %s12 = sadd.s32 0, 0
      %p13 = scmp.lt.s32.totalorder %s12, 0
      %s14 = scalar_select %p13, %s12, 0
      %s15 = smul.u32 2, %s14
      %s17 = ssub.s32 256, 256
      %18 = vsyncadd [#allocation4], %s17
      %s19 = smul.addr %s15, 128
      %s20 = scalar_lea.hbm %s0, %s19
      %s21 = sshll.u32 [#allocation3], 4
      %s22 = int_to_ptr.vmem [resolvable:$true] %s21
      %27 = dma.hbm_to_vmem [thread:$0]  %s20, 256, %s22, [#allocation4], 128, 128, 8
    $region5: #{tpu_custom_call.1} parent=1 // pred_fallthru
      _
    // Predicated region
    $region6: #{tpu_custom_call.1} parent=1 // pred_check
      _
    $region7: #{tpu_custom_call.1} parent=1 // pred_check_branch
      %29 = sbr.rel (0) target = $region9
    $region8: #{tpu_custom_call.1} parent=1 // pred_region
      %s30 = sadd.s32 0, 0
      %p31 = scmp.lt.s32.totalorder %s30, 0
      %s32 = scalar_select %p31, %s30, 0
      %s33 = smul.u32 2, %s32
      %s35 = ssub.s32 128, 128
      %36 = vsyncadd [#allocation7], %s35
      %s37 = smul.addr %s33, 64
      %s38 = scalar_lea.hbm %s1, %s37
      %s39 = sshll.u32 [#allocation6], 4
      %s40 = int_to_ptr.vmem [resolvable:$true] %s39
      %45 = dma.hbm_to_vmem [thread:$0]  %s38, 128, %s40, [#allocation7], 64, 64, 4
    $region9: #{tpu_custom_call.1} parent=1 // pred_fallthru
      _
    // Predicated region
    $region10: #{tpu_custom_call.1} parent=1 // pred_check
      _
    $region11: #{tpu_custom_call.1} parent=1 // pred_check_branch
      %47 = sbr.rel (0) target = $region13
    $region12: #{tpu_custom_call.1} parent=1 // pred_region
      %48 = dma.done [#allocation4], 256
    $region13: #{tpu_custom_call.1} parent=1 // pred_fallthru
      _
    // Predicated region
    $region14: #{tpu_custom_call.1} parent=1 // pred_check
      _
    $region15: #{tpu_custom_call.1} parent=1 // pred_check_branch
      %50 = sbr.rel (0) target = $region17
    $region16: #{tpu_custom_call.1} parent=1 // pred_region
      %51 = dma.done [#allocation7], 128
    $region17: #{tpu_custom_call.1} parent=1 // pred_fallthru
      _
    %s52 = sadd.s32 0, 0
    %p53 = scmp.lt.s32.totalorder %s52, 0
    %s54 = scalar_select %p53, %s52, 0
    %s55 = smul.u32 2, %s54
    %s56 = sadd.s32 0, 0
    %p57 = scmp.lt.s32.totalorder %s56, 0
    %s58 = scalar_select %p57, %s56, 0
    %s59 = smul.u32 2, %s58
    %p60 = scmp.eq.s32.totalorder 0, 0
    // Predicated region
    $region18: #{tpu_custom_call.1} parent=1 // pred_check
      %p61 = pneg %p60
    $region19: #{tpu_custom_call.1} parent=1 // pred_check_branch
      %63 = sbr.rel (%p61) target = $region21
    $region20: #{tpu_custom_call.1} parent=1 // pred_region
      %64 = vst [vmem:[#allocation2] sm:$0xff] 0.0
    $region21: #{tpu_custom_call.1} parent=1 // pred_fallthru
      _
    %v65 = vld [vmem:[#allocation3] sm:$0xff]
    %v66 = vld [vmem:[#allocation3 + $0x8] sm:$0xff]
    %v67 = vld [vmem:[#allocation6] sm:$0xf]
    %v68 = vld [vmem:[#allocation6 + $0x4] sm:$0xf]
    %v69 = vunpack.c.l.bf16 %v67
    %v70 = vunpack.c.l.bf16 %v68
    %vm71 = vcmp.eq.f32.partialorder %v69, 1.0
    %vm72 = vcmp.eq.f32.partialorder %v70, 1.0
    %v73 = vsel %vm71, 0.25, 0.75
    %v74 = vsel %vm72, 0.25, 0.75
    %v75 = vand.u32 2147483647, %v65
    %v76 = vand.u32 2147483647, %v66
    %v77 = vsub.f32 0.0, %v75
    %v78 = vsub.f32 0.0, %v76
    %v79 = vmul.f32 %v77, 1.442695
    %v80 = vpow.pop %v79
    %v81 = vmul.f32 %v78, 1.442695
    %v82 = vpow.pop %v81
    %v83 = vadd.f32 %v80, 1.0
    %v84 = vadd.f32 %v82, 1.0
    %v85 = vrcp.pop %v83
    %v86 = vrcp.pop %v84
    %v87 = vmul.f32 %v80, %v85
    %v88 = vmul.f32 %v82, %v86
    %vm89 = vcmp.ge.f32.partialorder %v65, 0.0
    %vm90 = vcmp.ge.f32.partialorder %v66, 0.0
    %v91 = vsel %vm89, %v85, %v87
    %v92 = vsel %vm90, %v86, %v88
    %v93 = vsel %vm89, %v87, %v85
    %v94 = vsel %vm90, %v88, %v86
    %v95 = vsel %vm71, %v93, %v91
    %v96 = vsel %vm72, %v94, %v92
    %v97 = vmax.f32 %v65, 0.0
    %v98 = vmax.f32 %v66, 0.0
    %v99 = vmul.f32 %v65, %v69
    %v100 = vmul.f32 %v66, %v70
    %v101 = vsub.f32 %v97, %v99
    %v102 = vsub.f32 %v98, %v100
    %v103 = vadd.f32 %v80, 1.0
    %v104 = vlog2.pop %v103
    %v105 = vmul.f32 %v104, 0.6931472
    %v106 = vmul.f32 -0.5, %v80
    %v107 = vadd.f32 %v106, 1.0
    %v108 = vmul.f32 %v107, %v80
    %v109 = vand.u32 2147483647, %v80
    %vm110 = vcmp.lt.f32.partialorder %v109, 0.0004427343
    %v111 = vsel %vm110, %v108, %v105
    %v112 = vadd.f32 %v82, 1.0
    %v113 = vlog2.pop %v112
    %v114 = vmul.f32 %v113, 0.6931472
    %v115 = vmul.f32 -0.5, %v82
    %v116 = vadd.f32 %v115, 1.0
    %v117 = vmul.f32 %v116, %v82
    %v118 = vand.u32 2147483647, %v82
    %vm119 = vcmp.lt.f32.partialorder %v118, 0.0004427343
    %v120 = vsel %vm119, %v117, %v114
    %v121 = vadd.f32 %v101, %v111
    %v122 = vadd.f32 %v102, %v120
    %v123 = vmul.f32 %v95, %v95
    %v124 = vmul.f32 %v96, %v96
    %v125 = vmul.f32 %v73, %v123
    %v126 = vmul.f32 %v74, %v124
    %v127 = vmul.f32 %v125, %v121
    %v128 = vmul.f32 %v126, %v122
    %v129 = vld [vmem:[#allocation2] sm:$0xff]
    %v130 = vadd.f32 %v127, %v128
    %v131 = vadd.f32 %v129, %v130
    %132 = vst [vmem:[#allocation2] sm:$0xff] %v131
    // Predicated region
    $region22: #{tpu_custom_call.1} parent=1 // pred_check
      %p133 = pneg %p60
    $region23: #{tpu_custom_call.1} parent=1 // pred_check_branch
      %135 = sbr.rel (%p133) target = $region25
    $region24: #{tpu_custom_call.1} parent=1 // pred_region
      %v136 = vld [vmem:[#allocation2] sm:$0xff]
      %137 = vadd.xlane.f32.xlu0 %v136
      %v138 = vpop.xlane.xlu0 %137
      %v139 = vrot.slane %v138, 4
      %v140 = vadd.f32 %v138, %v139
      %v141 = vrot.slane %v140, 2
      %v142 = vadd.f32 %v140, %v141
      %v143 = vrot.slane %v142, 1
      %v144 = vadd.f32 %v142, %v143
      %s145 = vtos %v144
      %s146 = scalar_lea.smem [#allocation8], 0
      %147 = sst [smem:[%s146]] %s145
    $region25: #{tpu_custom_call.1} parent=1 // pred_fallthru
      _
    // Predicated region
    $region26: #{tpu_custom_call.1} parent=1 // pred_check
      _
    $region27: #{tpu_custom_call.1} parent=1 // pred_check_branch
      %149 = sbr.rel (0) target = $region29
    $region28: #{tpu_custom_call.1} parent=1 // pred_region
      %s151 = ssub.s32 16, 16
      %152 = vsyncadd [#allocation5], %s151
      %155 = dma.smem_to_hbm [#allocation8], 16, %s2, [#allocation5]
    $region29: #{tpu_custom_call.1} parent=1 // pred_fallthru
      _
    // Predicated region
    $region30: #{tpu_custom_call.1} parent=1 // pred_check
      _
    $region31: #{tpu_custom_call.1} parent=1 // pred_check_branch
      %157 = sbr.rel (0) target = $region33
    $region32: #{tpu_custom_call.1} parent=1 // pred_region
      %158 = dma.done [#allocation5], 16
    $region33: #{tpu_custom_call.1} parent=1 // pred_fallthru
      _
    %159 = sfence
    %160 = vsyncpa [#allocation4], 1
    %161 = vsyncpa [#allocation7], 1
    %162 = vsyncpa [#allocation5], 1

</llo_original>
